<compile_context>
chip_gen: v7x
topology: tpu7x:2x2x1
jax: 0.10.0
libtpu: 0.0.40
codegen_flags: <defaults>
</compile_context>

<pallas_src>
import jax
import jax.numpy as jnp
from jax.experimental import pallas as pl
from jax.experimental.pallas import tpu as pltpu


def _policy_mlp_kernel(xy_ref, w1_ref, b1_ref, w2_ref, b2_ref, out_ref):
    # Layer 1: one fused dot over the packed [x ; y] tile. f32 accumulation on MXU.
    h = jnp.dot(xy_ref[...], w1_ref[...], preferred_element_type=jnp.float32)
    # Bias + ReLU stay f32 (native VPU path on v5e; negligible VALU cost anyway).
    h = jnp.maximum(h + b1_ref[...], 0.0)
    # Layer 2: cast activation to the weight dtype (bf16 keeps the MXU single-pass).
    logits = jnp.dot(h.astype(w2_ref.dtype), w2_ref[...],
                     preferred_element_type=jnp.float32) + b2_ref[...]
    out_ref[...] = logits.astype(out_ref.dtype)


def _round_up(v, m):
    return ((v + m - 1) // m) * m


def policy_forward(x, y, params, *, tb=2048, use_bf16=True):
    """logits = PolicyNet.forward(x, y)  (log pi(t | x, y))."""
    w1, b1, w2, b2 = params
    b, d_x = x.shape
    d_y = y.shape[1]
    d_in = d_x + d_y
    hidden = w1.shape[1]
    k = w2.shape[1]

    # Fuse torch.cat([x, y], -1) wrapper-side: a single packed operand lets layer 1
    # run as one MXU dot (two tiny-K dots would each cost a full vmatmul push).
    xy = jnp.concatenate([x, y], axis=-1)

    cdt = jnp.bfloat16 if use_bf16 else jnp.float32
    xy = xy.astype(cdt)
    w1c = w1.astype(cdt)
    w2c = w2.astype(cdt)
    b1f = jnp.asarray(b1, jnp.float32).reshape(1, hidden)
    b2f = jnp.asarray(b2, jnp.float32).reshape(1, k)

    # Batch tile: large enough to amortize per-step overhead, but ensure >=2 grid
    # blocks when B allows so the parallel axis can shard across v7x's 2 TCs.
    if b <= 16:
        tb = b                                   # single tile; block dim == array dim
    else:
        two_block = _round_up(pl.cdiv(b, 2), 8)  # <= b for b > 16
        tb = max(8, min(tb, two_block))
        tb = _round_up(tb, 8)
    grid = (pl.cdiv(b, tb),)

    row_spec = lambda cols: pl.BlockSpec((tb, cols), lambda i: (i, 0))
    const_spec = lambda shape: pl.BlockSpec(shape, lambda i: (0, 0))

    itemsize = 2 if use_bf16 else 4
    cost = pl.CostEstimate(
        flops=2 * b * (d_in * hidden + hidden * k),
        transcendentals=0,
        bytes_accessed=(b * d_in * itemsize                 # xy stream
                        + (d_in * hidden + hidden * k) * itemsize  # weights (once)
                        + (hidden + k) * 4                   # biases
                        + b * k * 4),                        # logits writeback
    )

    return pl.pallas_call(
        _policy_mlp_kernel,
        out_shape=jax.ShapeDtypeStruct((b, k), jnp.float32),
        grid=grid,
        in_specs=[
            row_spec(d_in),            # packed [x ; y]: streamed over batch tiles
            const_spec(w1c.shape),     # weights / biases: VMEM-resident, fetched once
            const_spec(b1f.shape),
            const_spec(w2c.shape),
            const_spec(b2f.shape),
        ],
        out_specs=row_spec(k),
        compiler_params=pltpu.CompilerParams(
            dimension_semantics=("parallel",),   # independent batch tiles -> 2 TCs on v7x
        ),
        cost_estimate=cost,
    )(xy, w1c, b1f, w2c, b2f)


def init_policy_params(key, d_x, d_y, k, hidden=128):
    """Deterministic init mimicking torch.nn.Linear default U[-1/sqrt(fan_in), 1/sqrt(fan_in)]."""
    k1, k2, k3, k4 = jax.random.split(key, 4)
    fan1 = d_x + d_y
    fan2 = hidden
    lim1 = 1.0 / jnp.sqrt(jnp.float32(fan1))
    lim2 = 1.0 / jnp.sqrt(jnp.float32(fan2))
    w1 = jax.random.uniform(k1, (fan1, hidden), jnp.float32, -lim1, lim1)
    b1 = jax.random.uniform(k2, (1, hidden), jnp.float32, -lim1, lim1)
    w2 = jax.random.uniform(k3, (hidden, k), jnp.float32, -lim2, lim2)
    b2 = jax.random.uniform(k4, (1, k), jnp.float32, -lim2, lim2)
    return w1, b1, w2, b2


def reference_forward(x, y, params):
    w1, b1, w2, b2 = params
    xy = jnp.concatenate([x, y], axis=-1)
    h = jnp.maximum(xy @ w1 + b1, 0.0)
    return h @ w2 + b2


if __name__ == "__main__":
    # small shapes consistent with PolicyNet(d_x, d_y, k, hidden_dims=(128,))
    B, d_x, d_y, K, H = 8, 16, 4, 3, 128

    key = jax.random.PRNGKey(0)
    kx, ky, kp = jax.random.split(key, 3)
    x = jax.random.normal(kx, (B, d_x), jnp.float32)
    y = jax.random.normal(ky, (B, d_y), jnp.float32)
    params = init_policy_params(kp, d_x, d_y, K, hidden=H)
    ref = reference_forward(x, y, params)

    # 1) exact-f32 parity path
    logits_f32 = jax.block_until_ready(policy_forward(x, y, params, use_bf16=False))
    assert logits_f32.shape == (B, K)
    assert jnp.allclose(logits_f32, ref, atol=1e-5, rtol=1e-5)

    # 2) default bf16-operand path (f32 accumulation/epilogue) at a looser tolerance
    logits_bf16 = jax.block_until_ready(policy_forward(x, y, params, use_bf16=True))
    assert jnp.allclose(logits_bf16, ref, atol=5e-2, rtol=5e-2)

    # 3) ragged batch (B not a multiple of 8, single partial tile)
    B2 = 13
    x2 = jax.random.normal(jax.random.PRNGKey(1), (B2, d_x), jnp.float32)
    y2 = jax.random.normal(jax.random.PRNGKey(2), (B2, d_y), jnp.float32)
    out2 = jax.block_until_ready(policy_forward(x2, y2, params, use_bf16=False))
    assert jnp.allclose(out2, reference_forward(x2, y2, params), atol=1e-5, rtol=1e-5)

    # 4) multi-block grid with a partial last tile (B=20, tb=8 -> grid=3, last tile 4 rows)
    B3 = 20
    x3 = jax.random.normal(jax.random.PRNGKey(3), (B3, d_x), jnp.float32)
    y3 = jax.random.normal(jax.random.PRNGKey(4), (B3, d_y), jnp.float32)
    out3 = jax.block_until_ready(policy_forward(x3, y3, params, tb=8, use_bf16=False))
    assert jnp.allclose(out3, reference_forward(x3, y3, params), atol=1e-5, rtol=1e-5)

    # TODO(synk): the optional dropout / norm_layer arms of make_mlp are None by default
    # and are not implemented in the kernel.
    print("KERNEL_OK")
</pallas_src>

<mosaic_0001>
module attributes {stable_mosaic.version = 11 : i64} {
  func.func @_policy_mlp_kernel(%arg0: i32, %arg1: memref<8x20xf32, #tpu.memory_space<vmem>>, %arg2: memref<20x128xf32, #tpu.memory_space<vmem>>, %arg3: memref<1x128xf32, #tpu.memory_space<vmem>>, %arg4: memref<128x3xf32, #tpu.memory_space<vmem>>, %arg5: memref<1x3xf32, #tpu.memory_space<vmem>>, %arg6: memref<8x3xf32, #tpu.memory_space<vmem>>) attributes {dimension_semantics = [#tpu.dimension_semantics<parallel>], iteration_bounds = array<i64: 1>, scalar_prefetch = 0 : i64, scratch_operands = 0 : i64, tpu.core_type = #tpu.core_type<tc>, window_params = [{transform_indices = @transform_0, window_bounds = array<i64: 8, 20>}, {pipeline_mode = #tpu.pipeline_mode<synchronous>, transform_indices = @transform_1, window_bounds = array<i64: 20, 128>}, {pipeline_mode = #tpu.pipeline_mode<synchronous>, transform_indices = @transform_2, window_bounds = array<i64: 1, 128>}, {pipeline_mode = #tpu.pipeline_mode<synchronous>, transform_indices = @transform_3, window_bounds = array<i64: 128, 3>}, {pipeline_mode = #tpu.pipeline_mode<synchronous>, transform_indices = @transform_4, window_bounds = array<i64: 1, 3>}, {transform_indices = @transform_5, window_bounds = array<i64: 8, 3>}]} {
    %c0 = arith.constant 0 : index
    %c0_0 = arith.constant 0 : index
    %0 = vector.load %arg1[%c0, %c0_0] : memref<8x20xf32, #tpu.memory_space<vmem>>, vector<8x20xf32>
    %c0_1 = arith.constant 0 : index
    %c0_2 = arith.constant 0 : index
    %1 = vector.load %arg2[%c0_1, %c0_2] : memref<20x128xf32, #tpu.memory_space<vmem>>, vector<20x128xf32>
    %cst = arith.constant dense<0.000000e+00> : vector<8x128xf32>
    %2 = tpu.matmul %0, %1, %cst {dimension_numbers = #tpu.dot_dimension_numbers<[1], [0], [0], [1], [0, 0, 1, 1], [], []>} : vector<8x20xf32>, vector<20x128xf32>, vector<8x128xf32> -> vector<8x128xf32>
    %c0_3 = arith.constant 0 : index
    %c0_4 = arith.constant 0 : index
    %3 = vector.load %arg3[%c0_3, %c0_4] : memref<1x128xf32, #tpu.memory_space<vmem>>, vector<1x128xf32>
    %4 = vector.broadcast %3 : vector<1x128xf32> to vector<8x128xf32>
    %5 = arith.addf %2, %4 : vector<8x128xf32>
    %cst_5 = arith.constant 0.000000e+00 : f32
    %6 = vector.broadcast %cst_5 : f32 to vector<8x128xf32>
    %7 = arith.maximumf %5, %6 : vector<8x128xf32>
    %c0_6 = arith.constant 0 : index
    %c0_7 = arith.constant 0 : index
    %8 = vector.load %arg4[%c0_6, %c0_7] : memref<128x3xf32, #tpu.memory_space<vmem>>, vector<128x3xf32>
    %cst_8 = arith.constant dense<0.000000e+00> : vector<8x3xf32>
    %9 = tpu.matmul %7, %8, %cst_8 {dimension_numbers = #tpu.dot_dimension_numbers<[1], [0], [0], [1], [0, 0, 1, 1], [], []>} : vector<8x128xf32>, vector<128x3xf32>, vector<8x3xf32> -> vector<8x3xf32>
    %c0_9 = arith.constant 0 : index
    %c0_10 = arith.constant 0 : index
    %10 = vector.load %arg5[%c0_9, %c0_10] : memref<1x3xf32, #tpu.memory_space<vmem>>, vector<1x3xf32>
    %11 = vector.broadcast %10 : vector<1x3xf32> to vector<8x3xf32>
    %12 = arith.addf %9, %11 : vector<8x3xf32>
    %c0_11 = arith.constant 0 : index
    %c0_12 = arith.constant 0 : index
    %13 = vector.load %arg6[%c0_11, %c0_12] : memref<8x3xf32, #tpu.memory_space<vmem>>, vector<8x3xf32>
    tpu.vector_store %arg6[%c0_11, %c0_12], %12 {strides = array<i32>} : memref<8x3xf32, #tpu.memory_space<vmem>>, vector<8x3xf32>,
    return
  }
  func.func @transform_0(%arg0: i32) -> (i32, i32) {
    %c0_i32 = arith.constant 0 : i32
    %c0_i32_0 = arith.constant 0 : i32
    return %arg0, %c0_i32 : i32, i32
  }
  func.func @transform_1(%arg0: i32) -> (i32, i32) {
    %c0_i32 = arith.constant 0 : i32
    %c0_i32_0 = arith.constant 0 : i32
    %c0_i32_1 = arith.constant 0 : i32
    return %c0_i32, %c0_i32_0 : i32, i32
  }
  func.func @transform_2(%arg0: i32) -> (i32, i32) {
    %c0_i32 = arith.constant 0 : i32
    %c0_i32_0 = arith.constant 0 : i32
    %c0_i32_1 = arith.constant 0 : i32
    return %c0_i32, %c0_i32_0 : i32, i32
  }
  func.func @transform_3(%arg0: i32) -> (i32, i32) {
    %c0_i32 = arith.constant 0 : i32
    %c0_i32_0 = arith.constant 0 : i32
    %c0_i32_1 = arith.constant 0 : i32
    return %c0_i32, %c0_i32_0 : i32, i32
  }
  func.func @transform_4(%arg0: i32) -> (i32, i32) {
    %c0_i32 = arith.constant 0 : i32
    %c0_i32_0 = arith.constant 0 : i32
    %c0_i32_1 = arith.constant 0 : i32
    return %c0_i32, %c0_i32_0 : i32, i32
  }
  func.func @transform_5(%arg0: i32) -> (i32, i32) {
    %c0_i32 = arith.constant 0 : i32
    %c0_i32_0 = arith.constant 0 : i32
    return %arg0, %c0_i32 : i32, i32
  }
}

</mosaic_0001>

<llo_original>
// kernel: tpu_custom_call.1
$region0: #{tpu_custom_call.1}
  #allocation0 [shape = 'u32[]', space=smem, size = 0x4, offset = 0x4, fixed_abs, tag = 'smem constant byte address 0x4 - core index']
  #allocation1 [shape = 'u32[144,128]{1,0:T(1,128)}', space=vmem, size = 0x12000, scoped, tag = 'internal scratch']
  %s0 = inlined_call_operand.vmem [shape: f32[8,20], index: 0, kind: input, shape index: {}]
  %s1 = inlined_call_operand.vmem [shape: f32[20,128], index: 1, kind: input, shape index: {}]
  %s2 = inlined_call_operand.vmem [shape: f32[1,128], index: 2, kind: input, shape index: {}]
  %s3 = inlined_call_operand.vmem [shape: f32[128,3], index: 3, kind: input, shape index: {}]
  %s4 = inlined_call_operand.vmem [shape: f32[1,3], index: 4, kind: input, shape index: {}]
  %s5 = inlined_call_operand.vmem [shape: f32[8,3], index: 5, kind: output, shape index: {}]
  %s6 = sld [smem:[#allocation0]]
  $region30: #{tpu_custom_call.1} parent=0
    _
  %s8 = ssub.s32 1, %s6
  %s9 = scalar_select 0, %s8, %s6
  // Predicated region
  $region2: #{tpu_custom_call.1} parent=0 // pred_check
    _
  $region3: #{tpu_custom_call.1} parent=0 // pred_check_branch
    %11 = sbr.rel (0) target = $region5
  $region4: #{tpu_custom_call.1} parent=0 // pred_region
    _
  $region5: #{tpu_custom_call.1} parent=0 // pred_fallthru
    _
  // Predicated region
  $region6: #{tpu_custom_call.1} parent=0 // pred_check
    _
  $region7: #{tpu_custom_call.1} parent=0 // pred_check_branch
    %13 = sbr.rel (0) target = $region9
  $region8: #{tpu_custom_call.1} parent=0 // pred_region
    _
  $region9: #{tpu_custom_call.1} parent=0 // pred_fallthru
    _
  // Predicated region
  $region10: #{tpu_custom_call.1} parent=0 // pred_check
    _
  $region11: #{tpu_custom_call.1} parent=0 // pred_check_branch
    %15 = sbr.rel (0) target = $region13
  $region12: #{tpu_custom_call.1} parent=0 // pred_region
    _
  $region13: #{tpu_custom_call.1} parent=0 // pred_fallthru
    _
  // Predicated region
  $region14: #{tpu_custom_call.1} parent=0 // pred_check
    _
  $region15: #{tpu_custom_call.1} parent=0 // pred_check_branch
    %17 = sbr.rel (0) target = $region17
  $region16: #{tpu_custom_call.1} parent=0 // pred_region
    _
  $region17: #{tpu_custom_call.1} parent=0 // pred_fallthru
    _
  // Predicated region
  $region18: #{tpu_custom_call.1} parent=0 // pred_check
    _
  $region19: #{tpu_custom_call.1} parent=0 // pred_check_branch
    %19 = sbr.rel (0) target = $region21
  $region20: #{tpu_custom_call.1} parent=0 // pred_region
    _
  $region21: #{tpu_custom_call.1} parent=0 // pred_fallthru
    _
  %v20 = vld [vmem:[%s0] sm:$0xff]
  %v21 = vld [vmem:[%s1] sm:$0xff]
  %v22 = vld [vmem:[%s1 + $0x8] sm:$0xff]
  %v23 = vld [vmem:[%s1 + $0x10] sm:$0xf]
  %v24 = vld [vmem:[%s2] sm:$0x1]
  %v26 = vlaneseq
  %v27 = vshrl.u32 %v26, 7
  %v28 = vsub.s32 0, %v27
  %v29 = vrot.slane %v24, %v28
  %vm31 = vcmask 162816
  %v33 = vsel %vm31, %v20, 0
  %vm35 = vcmask 1043456
  %v37 = vsel %vm35, %v23, 0
  %39 = vmatprep.subr.mxu0 0.0
  %40 = vmatpush1.msra.mxu0 %v21
  %41 = vmatprep.subr.mxu0 0.0
  %42 = vmatpush1.msra.mxu0 %v22
  %43 = vmatprep.subr.mxu0 0.0
  %44 = vmatpush1.msra.mxu0 %v37
  %45 = vmatprep.subr.mxu0 0.0
  %46 = vmatpush1.msra.mxu0 0.0
  %47 = vmatprep.subr.mxu0 0.0
  %48 = vmatpush1.msra.mxu0 0.0
  %49 = vmatprep.subr.mxu0 0.0
  %50 = vmatpush1.msra.mxu0 0.0
  %51 = vmatprep.subr.mxu0 0.0
  %52 = vmatpush1.msra.mxu0 0.0
  %53 = vmatprep.subr.mxu0 0.0
  %54 = vmatpush1.msra.mxu0 0.0
  %55 = vmatprep.subr.mxu0 0.0
  %56 = vmatpush1.msra.mxu0 0.0
  %57 = vmatprep.subr.mxu0 0.0
  %58 = vmatpush1.msra.mxu0 0.0
  %59 = vmatprep.subr.mxu0 0.0
  %60 = vmatpush1.msra.mxu0 0.0
  %61 = vmatprep.subr.mxu0 0.0
  %62 = vmatpush1.msra.mxu0 0.0
  %63 = vmatprep.subr.mxu0 0.0
  %64 = vmatpush1.msra.mxu0 0.0
  %65 = vmatprep.subr.mxu0 0.0
  %66 = vmatpush1.msra.mxu0 0.0
  %67 = vmatprep.subr.mxu0 0.0
  %68 = vmatpush1.msra.mxu0 0.0
  %69 = vmatprep.subr.mxu0 0.0
  %70 = vmatpush1.msra.mxu0 0.0
  %71 = vmatprep.subr.mxu0 0.0
  %72 = vmatpush1.msra.mxu0 0.0
  %73 = vmatprep.subr.mxu0 0.0
  %74 = vmatpush1.msra.mxu0 0.0
  %75 = vmatprep.subr.mxu0 0.0
  %76 = vmatpush1.msra.mxu0 0.0
  %77 = vmatprep.subr.mxu0 0.0
  %78 = vmatpush1.msra.mxu0 0.0
  %79 = vmatprep.subr.mxu0 0.0
  %80 = vmatpush1.msra.mxu0 0.0
  %81 = vmatprep.subr.mxu0 0.0
  %82 = vmatpush1.msra.mxu0 0.0
  %83 = vmatprep.subr.mxu0 0.0
  %84 = vmatpush1.msra.mxu0 0.0
  %85 = vmatprep.subr.mxu0 0.0
  %86 = vmatpush1.msra.mxu0 0.0
  %87 = vmatprep.subr.mxu0 0.0
  %88 = vmatpush1.msra.mxu0 0.0
  %89 = vmatprep.subr.mxu0 0.0
  %90 = vmatpush1.msra.mxu0 0.0
  %91 = vmatprep.subr.mxu0 0.0
  %92 = vmatpush1.msra.mxu0 0.0
  %93 = vmatprep.subr.mxu0 0.0
  %94 = vmatpush1.msra.mxu0 0.0
  %95 = vmatprep.subr.mxu0 0.0
  %96 = vmatpush1.msra.mxu0 0.0
  %97 = vmatprep.subr.mxu0 0.0
  %98 = vmatpush1.msra.mxu0 0.0
  %99 = vmatprep.subr.mxu0 0.0
  %100 = vmatpush1.msra.mxu0 0.0
  %101 = vmatprep.subr.mxu0 0.0
  %102 = vmatpush1.msra.mxu0 0.0
  %103 = vmatprep.mubr.f32.mxu0 0.0
  %104 = vmatmul.mubr.f32.gmra.mrb[0].mxu0 %v33
  %v105 = vpop.f32.mrb[0].mxu0
  %v106 = vadd.f32 %v29, %v105
  %v107 = vpop.f32.mrb[0].mxu0
  %108 = vdwg.mxu0
  %v109 = vmax.f32 %v106, 0.0
  %v110 = vld [vmem:[%s3] sm:$0xff]
  %v111 = vld [vmem:[%s3 + $0x8] sm:$0xff]
  %v112 = vld [vmem:[%s3 + $0x10] sm:$0xff]
  %v113 = vld [vmem:[%s3 + $0x18] sm:$0xff]
  %v114 = vld [vmem:[%s3 + $0x20] sm:$0xff]
  %v115 = vld [vmem:[%s3 + $0x28] sm:$0xff]
  %v116 = vld [vmem:[%s3 + $0x30] sm:$0xff]
  %v117 = vld [vmem:[%s3 + $0x38] sm:$0xff]
  %v118 = vld [vmem:[%s3 + $0x40] sm:$0xff]
  %v119 = vld [vmem:[%s3 + $0x48] sm:$0xff]
  %v120 = vld [vmem:[%s3 + $0x50] sm:$0xff]
  %v121 = vld [vmem:[%s3 + $0x58] sm:$0xff]
  %v122 = vld [vmem:[%s3 + $0x60] sm:$0xff]
  %v123 = vld [vmem:[%s3 + $0x68] sm:$0xff]
  %v124 = vld [vmem:[%s3 + $0x70] sm:$0xff]
  %v125 = vld [vmem:[%s3 + $0x78] sm:$0xff]
  %v126 = vld [vmem:[%s4] sm:$0x1]
  %v128 = vlaneseq
  %v129 = vshrl.u32 %v128, 7
  %v130 = vsub.s32 0, %v129
  %v131 = vrot.slane %v126, %v130
  %133 = vmatprep.subr.mxu0 0.0
  %134 = vmatpush1.msra.mxu0 %v110
  %135 = vmatprep.subr.mxu0 0.0
  %136 = vmatpush1.msra.mxu0 %v111
  %137 = vmatprep.subr.mxu0 0.0
  %138 = vmatpush1.msra.mxu0 %v112
  %139 = vmatprep.subr.mxu0 0.0
  %140 = vmatpush1.msra.mxu0 %v113
  %141 = vmatprep.subr.mxu0 0.0
  %142 = vmatpush1.msra.mxu0 %v114
  %143 = vmatprep.subr.mxu0 0.0
  %144 = vmatpush1.msra.mxu0 %v115
  %145 = vmatprep.subr.mxu0 0.0
  %146 = vmatpush1.msra.mxu0 %v116
  %147 = vmatprep.subr.mxu0 0.0
  %148 = vmatpush1.msra.mxu0 %v117
  %149 = vmatprep.subr.mxu0 0.0
  %150 = vmatpush1.msra.mxu0 %v118
  %151 = vmatprep.subr.mxu0 0.0
  %152 = vmatpush1.msra.mxu0 %v119
  %153 = vmatprep.subr.mxu0 0.0
  %154 = vmatpush1.msra.mxu0 %v120
  %155 = vmatprep.subr.mxu0 0.0
  %156 = vmatpush1.msra.mxu0 %v121
  %157 = vmatprep.subr.mxu0 0.0
  %158 = vmatpush1.msra.mxu0 %v122
  %159 = vmatprep.subr.mxu0 0.0
  %160 = vmatpush1.msra.mxu0 %v123
  %161 = vmatprep.subr.mxu0 0.0
  %162 = vmatpush1.msra.mxu0 %v124
  %163 = vmatprep.subr.mxu0 0.0
  %164 = vmatpush1.msra.mxu0 %v125
  %165 = vmatprep.subr.mxu0 0.0
  %166 = vmatpush1.msra.mxu0 0.0
  %167 = vmatprep.subr.mxu0 0.0
  %168 = vmatpush1.msra.mxu0 0.0
  %169 = vmatprep.subr.mxu0 0.0
  %170 = vmatpush1.msra.mxu0 0.0
  %171 = vmatprep.subr.mxu0 0.0
  %172 = vmatpush1.msra.mxu0 0.0
  %173 = vmatprep.subr.mxu0 0.0
  %174 = vmatpush1.msra.mxu0 0.0
  %175 = vmatprep.subr.mxu0 0.0
  %176 = vmatpush1.msra.mxu0 0.0
  %177 = vmatprep.subr.mxu0 0.0
  %178 = vmatpush1.msra.mxu0 0.0
  %179 = vmatprep.subr.mxu0 0.0
  %180 = vmatpush1.msra.mxu0 0.0
  %181 = vmatprep.subr.mxu0 0.0
  %182 = vmatpush1.msra.mxu0 0.0
  %183 = vmatprep.subr.mxu0 0.0
  %184 = vmatpush1.msra.mxu0 0.0
  %185 = vmatprep.subr.mxu0 0.0
  %186 = vmatpush1.msra.mxu0 0.0
  %187 = vmatprep.subr.mxu0 0.0
  %188 = vmatpush1.msra.mxu0 0.0
  %189 = vmatprep.subr.mxu0 0.0
  %190 = vmatpush1.msra.mxu0 0.0
  %191 = vmatprep.subr.mxu0 0.0
  %192 = vmatpush1.msra.mxu0 0.0
  %193 = vmatprep.subr.mxu0 0.0
  %194 = vmatpush1.msra.mxu0 0.0
  %195 = vmatprep.subr.mxu0 0.0
  %196 = vmatpush1.msra.mxu0 0.0
  %197 = vmatprep.mubr.f32.mxu0 0.0
  %198 = vmatmul.mubr.f32.gmra.mrb[0].mxu0 %v109
  %v199 = vpop.f32.mrb[0].mxu0
  %v200 = vadd.f32 %v131, %v199
  %v201 = vpop.f32.mrb[0].mxu0
  %202 = vdwg.mxu0
  %vm203 = vcmask 23552
  %204 = vst.msk [vmem:[%s5] sm:$0xff] %vm203, %v200
  // Predicated region
  $region22: #{tpu_custom_call.1} parent=0 // pred_check
    _
  $region23: #{tpu_custom_call.1} parent=0 // pred_check_branch
    %206 = sbr.rel (0) target = $region25
  $region24: #{tpu_custom_call.1} parent=0 // pred_region
    _
  $region25: #{tpu_custom_call.1} parent=0 // pred_fallthru
    _
  // Predicated region
  $region26: #{tpu_custom_call.1} parent=0 // pred_check
    _
  $region27: #{tpu_custom_call.1} parent=0 // pred_check_branch
    %208 = sbr.rel (0) target = $region29
  $region28: #{tpu_custom_call.1} parent=0 // pred_region
    _
  $region29: #{tpu_custom_call.1} parent=0 // pred_fallthru
    _

</llo_original>
